<compile_context>
chip_gen: v7x
topology: tpu7x:2x2x1
jax: 0.10.0
libtpu: 0.0.40
codegen_flags: <defaults>
</compile_context>

<pallas_src>
import math
import numpy as np
import jax
import jax.numpy as jnp
from jax import lax
from jax.experimental import pallas as pl
from jax.experimental.pallas import tpu as pltpu


# ----------------------------- configuration -----------------------------
NHEAD = 2            # Model_Config_dict['nhead']
OUT_LEN = 16         # GAT_hid_len
F_IN = 32            # node_feature_hid_len
EDGE_FEATS = 8       # edge_feats_len
NEG_SLOPE = 0.2      # LeakyReLU negative_slope
N_ETYPES = 3         # canonical edge types from the source node type

N_HEAD_NODES = 16            # nodes of each source type
TAIL_SIZES = (8, 8, 16)      # dst-node counts per edge type (concatenated)
N_TAIL_NODES = sum(TAIL_SIZES)
N_ALL_NODES = N_HEAD_NODES + N_TAIL_NODES
HO = NHEAD * OUT_LEN

N_SRC_TYPES = 3              # batched source node types -> grid axis


# ------------------------------ Pallas kernel ------------------------------
def simple_hgn_kernel(x_ref, w_ref, al_ref, arblk_ref, he_ref, mask_ref,
                      out_ref):
    # Fused projection of head + tail node features: one MXU push.
    h_all = jnp.dot(x_ref[...], w_ref[...],
                    preferred_element_type=jnp.float32)        # (Nh+Nt, HO)
    hh = h_all[:N_HEAD_NODES, :]                               # (Nh, HO)
    ht = h_all[N_HEAD_NODES:, :]                               # (Nt, HO)

    # Per-tail row attention terms for ALL heads in one small dot:
    #   row_terms[h, j] = a_r[h] . h_tail_h[j]  +  (a_e[h] . e[etype(j)])
    # (second term precomputed in the wrapper and passed as he_ref).
    row_terms = lax.dot_general(
        arblk_ref[...], ht,
        dimension_numbers=(((1,), (1,)), ((), ())),
        preferred_element_type=jnp.float32) + he_ref[...]      # (NHEAD, Nt)

    mask = mask_ref[...] > 0.0                                 # (Nh, Nt)
    neg_inf = jnp.finfo(jnp.float32).min                       # dtype-aware sentinel

    out_heads = []
    for h in range(NHEAD):                                     # static, tiny
        hh_h = hh[:, h * OUT_LEN:(h + 1) * OUT_LEN]            # (Nh, O)
        ht_h = ht[:, h * OUT_LEN:(h + 1) * OUT_LEN]            # (Nt, O)

        # (a_l . h_head) via VPU multiply + lane reduce (no 1-row matmul).
        h_l = jnp.sum(hh_h * al_ref[h:h + 1, :], axis=-1,
                      keepdims=True)                           # (Nh, 1)

        s = h_l + row_terms[h:h + 1, :]                        # (Nh, Nt)
        s = jnp.where(s > 0, s, NEG_SLOPE * s)                 # LeakyReLU
        s = jnp.where(mask, s, neg_inf)                        # only real edges

        # masked softmax over tails (== torch.sparse.softmax(dim=1))
        m = jnp.max(s, axis=-1, keepdims=True)
        p = jnp.where(mask, jnp.exp(s - m), 0.0)
        denom = jnp.maximum(jnp.sum(p, axis=-1, keepdims=True), 1e-30)
        inv = pl.reciprocal(denom, approx=True)                # EUP slot
        inv = inv * (2.0 - denom * inv)                        # one Newton step
        p = p * inv

        # aggregation (== torch.sparse.mm(att_n, h_tail[:, n, :]))
        out_heads.append(jnp.dot(p, ht_h,
                                 preferred_element_type=jnp.float32))

    out = jnp.concatenate(out_heads, axis=-1)                  # (Nh, HO)
    # ELU(alpha=1); exp only on the non-positive branch (no inf on dead lanes).
    out = jnp.where(out > 0, out, jnp.exp(jnp.minimum(out, 0.0)) - 1.0)
    out_ref[...] = out.astype(out_ref.dtype)                   # one lane-dense store


def simple_hgn_pallas(x_all, W, a_l, ar_block, h_e, adj_mask):
    """x_all: (B, Nh+Nt, F_IN); h_e: (B, NHEAD, Nt); adj_mask: (B, Nh, Nt)."""
    B = x_all.shape[0]
    return pl.pallas_call(
        simple_hgn_kernel,
        out_shape=jax.ShapeDtypeStruct((B, N_HEAD_NODES, HO), jnp.float32),
        grid=(B,),
        in_specs=[
            pl.BlockSpec((None, N_ALL_NODES, F_IN), lambda b: (b, 0, 0)),
            pl.BlockSpec((F_IN, HO), lambda b: (0, 0)),          # shared params
            pl.BlockSpec((NHEAD, OUT_LEN), lambda b: (0, 0)),
            pl.BlockSpec((NHEAD, HO), lambda b: (0, 0)),
            pl.BlockSpec((None, NHEAD, N_TAIL_NODES), lambda b: (b, 0, 0)),
            pl.BlockSpec((None, N_HEAD_NODES, N_TAIL_NODES), lambda b: (b, 0, 0)),
        ],
        out_specs=pl.BlockSpec((None, N_HEAD_NODES, HO), lambda b: (b, 0, 0)),
        compiler_params=pltpu.CompilerParams(
            dimension_semantics=("parallel",)),
    )(x_all, W, a_l, ar_block, h_e, adj_mask)


# --------------------------- parameter construction ---------------------------
def _uniform_reset(key, shape):
    """Mirror of SimpleHGNLayer.reset_parameters: U(-stdv, stdv)."""
    stdv = math.sqrt(6.0 / (shape[-2] + shape[-1]))
    return jax.random.uniform(key, shape, jnp.float32, -stdv, stdv)


def make_params(key):
    ks = jax.random.split(key, 6)
    W = _uniform_reset(ks[0], (F_IN, OUT_LEN * NHEAD))
    W_e = _uniform_reset(ks[1], (EDGE_FEATS, EDGE_FEATS * NHEAD))
    a_l = _uniform_reset(ks[2], (1, NHEAD, OUT_LEN))
    a_r = _uniform_reset(ks[3], (1, NHEAD, OUT_LEN))
    a_e = _uniform_reset(ks[4], (1, NHEAD, EDGE_FEATS))
    edge_emb = _uniform_reset(ks[5], (N_ETYPES, EDGE_FEATS))
    return dict(W=W, W_e=W_e, a_l=a_l, a_r=a_r, a_e=a_e, edge_emb=edge_emb)


def fold_params(params, tail_etype):
    """Fold all parameter-only math out of the kernel (performance review #1)."""
    a_l = params['a_l'][0]                                      # (NHEAD, OUT)
    a_r = params['a_r'][0]                                      # (NHEAD, OUT)
    a_e = params['a_e'][0]                                      # (NHEAD, EF)
    e = (params['edge_emb'] @ params['W_e']).reshape(N_ETYPES, NHEAD, EDGE_FEATS)
    he_per_type = jnp.sum(a_e[None] * e, axis=-1)               # (ET, NHEAD)
    h_e = he_per_type[tail_etype].T                             # (NHEAD, Nt)
    # block-diagonal a_r so one dot yields every head's (1, Nt) row term
    ar_block = (jnp.eye(NHEAD, dtype=jnp.float32)[:, :, None]
                * a_r[None, :, :]).reshape(NHEAD, HO)           # (NHEAD, HO)
    return a_l, ar_block, h_e


# ------------------------- pure-JAX reference (edge list) -------------------------
def reference(x_head, x_tail, p, head_ind, tail_ind, edge_etype):
    Nh = x_head.shape[0]
    hh = (x_head @ p['W']).reshape(Nh, NHEAD, OUT_LEN)
    ht = (x_tail @ p['W']).reshape(-1, NHEAD, OUT_LEN)
    e = (p['edge_emb'] @ p['W_e']).reshape(-1, NHEAD, EDGE_FEATS)
    h_e_pt = (p['a_e'] * e).sum(-1)                   # (ET, H)
    h_l = (p['a_l'] * hh).sum(-1)                     # (Nh, H)
    h_r = (p['a_r'] * ht).sum(-1)                     # (Nt, H)
    att = h_l[head_ind] + h_r[tail_ind] + h_e_pt[edge_etype]      # (E, H)
    att = jnp.where(att > 0, att, NEG_SLOPE * att)
    seg_max = jax.ops.segment_max(att, head_ind, num_segments=Nh)
    pr = jnp.exp(att - seg_max[head_ind])
    seg_sum = jax.ops.segment_sum(pr, head_ind, num_segments=Nh)
    pr = pr / seg_sum[head_ind]
    msg = pr[:, :, None] * ht[tail_ind]
    out = jax.ops.segment_sum(msg, head_ind, num_segments=Nh)
    out = out.reshape(Nh, NHEAD * OUT_LEN)
    return jnp.where(out > 0, out, jnp.exp(out) - 1.0)            # ELU


# ---------------------------------- main ----------------------------------
if __name__ == "__main__":
    key = jax.random.PRNGKey(0)
    k_par, k_feat = jax.random.split(key, 2)
    params = make_params(k_par)

    rng = np.random.default_rng(0)
    # edge type of each tail node (tails concatenated per canonical etype)
    tail_etype_np = np.concatenate(
        [np.full(sz, t, np.int32) for t, sz in enumerate(TAIL_SIZES)])

    a_l_k, ar_block, h_e_one = fold_params(params, jnp.asarray(tail_etype_np))

    x_all_list, he_list, mask_list, ref_outs = [], [], [], []
    feat_keys = jax.random.split(k_feat, N_SRC_TYPES)
    for b in range(N_SRC_TYPES):
        kb_h, kb_t = jax.random.split(feat_keys[b])
        x_head = jax.random.normal(kb_h, (N_HEAD_NODES, F_IN), jnp.float32)
        x_tail = jax.random.normal(kb_t, (N_TAIL_NODES, F_IN), jnp.float32)

        # adjacency mask [Nh, Nt]: random + guarantee >=1 edge per head node
        mask_np = (rng.random((N_HEAD_NODES, N_TAIL_NODES)) < 0.3).astype(np.float32)
        for i in range(N_HEAD_NODES):
            mask_np[i, i % N_TAIL_NODES] = 1.0

        x_all_list.append(jnp.concatenate([x_head, x_tail], axis=0))
        he_list.append(h_e_one)
        mask_list.append(jnp.asarray(mask_np))

        # explicit edge lists for the reference (== torch sparse semantics)
        head_ind_np, tail_ind_np = np.nonzero(mask_np)
        edge_etype_np = tail_etype_np[tail_ind_np]
        ref_outs.append(reference(x_head, x_tail, params,
                                  jnp.asarray(head_ind_np),
                                  jnp.asarray(tail_ind_np),
                                  jnp.asarray(edge_etype_np)))

    x_all = jnp.stack(x_all_list)      # (B, Nh+Nt, F_IN)
    h_e = jnp.stack(he_list)           # (B, NHEAD, Nt)
    adj_mask = jnp.stack(mask_list)    # (B, Nh, Nt)

    out_kernel = simple_hgn_pallas(x_all, params['W'], a_l_k, ar_block,
                                   h_e, adj_mask)
    out_kernel = jax.block_until_ready(out_kernel)

    # MTL-layer style result: dict keyed by source node type
    inter_srctype_feature = {f"src_{b}": out_kernel[b] for b in range(N_SRC_TYPES)}

    out_ref = jax.block_until_ready(jnp.stack(ref_outs))
    np.testing.assert_allclose(np.asarray(out_kernel), np.asarray(out_ref),
                               rtol=1e-3, atol=1e-4)
    print("KERNEL_OK")
</pallas_src>

<mosaic_0001>
module attributes {stable_mosaic.version = 11 : i64} {
  func.func @simple_hgn_kernel(%arg0: i32, %arg1: memref<1x48x32xf32, #tpu.memory_space<vmem>>, %arg2: memref<32x32xf32, #tpu.memory_space<vmem>>, %arg3: memref<2x16xf32, #tpu.memory_space<vmem>>, %arg4: memref<2x32xf32, #tpu.memory_space<vmem>>, %arg5: memref<1x2x32xf32, #tpu.memory_space<vmem>>, %arg6: memref<1x16x32xf32, #tpu.memory_space<vmem>>, %arg7: memref<1x16x32xf32, #tpu.memory_space<vmem>>) attributes {dimension_semantics = [#tpu.dimension_semantics<parallel>], iteration_bounds = array<i64: 3>, scalar_prefetch = 0 : i64, scratch_operands = 0 : i64, tpu.core_type = #tpu.core_type<tc>, window_params = [{transform_indices = @transform_0, window_bounds = array<i64: 1, 48, 32>}, {pipeline_mode = #tpu.pipeline_mode<synchronous>, transform_indices = @transform_1, window_bounds = array<i64: 32, 32>}, {pipeline_mode = #tpu.pipeline_mode<synchronous>, transform_indices = @transform_2, window_bounds = array<i64: 2, 16>}, {pipeline_mode = #tpu.pipeline_mode<synchronous>, transform_indices = @transform_3, window_bounds = array<i64: 2, 32>}, {transform_indices = @transform_4, window_bounds = array<i64: 1, 2, 32>}, {transform_indices = @transform_5, window_bounds = array<i64: 1, 16, 32>}, {transform_indices = @transform_6, window_bounds = array<i64: 1, 16, 32>}]} {
    %c0 = arith.constant 0 : index
    %c0_0 = arith.constant 0 : index
    %c0_1 = arith.constant 0 : index
    %0 = vector.load %arg1[%c0, %c0_0, %c0_1] : memref<1x48x32xf32, #tpu.memory_space<vmem>>, vector<1x48x32xf32>
    %1 = vector.shape_cast %0 : vector<1x48x32xf32> to vector<48x32xf32>
    %c0_2 = arith.constant 0 : index
    %c0_3 = arith.constant 0 : index
    %2 = vector.load %arg2[%c0_2, %c0_3] : memref<32x32xf32, #tpu.memory_space<vmem>>, vector<32x32xf32>
    %cst = arith.constant dense<0.000000e+00> : vector<48x32xf32>
    %3 = tpu.matmul %1, %2, %cst {dimension_numbers = #tpu.dot_dimension_numbers<[1], [0], [0], [1], [0, 0, 1, 1], [], []>} : vector<48x32xf32>, vector<32x32xf32>, vector<48x32xf32> -> vector<48x32xf32>
    %4 = vector.extract_strided_slice %3 {offsets = [0, 0], sizes = [16, 32], strides = [1, 1]} : vector<48x32xf32> to vector<16x32xf32>
    %5 = vector.extract_strided_slice %3 {offsets = [16, 0], sizes = [32, 32], strides = [1, 1]} : vector<48x32xf32> to vector<32x32xf32>
    %c0_4 = arith.constant 0 : index
    %c0_5 = arith.constant 0 : index
    %6 = vector.load %arg4[%c0_4, %c0_5] : memref<2x32xf32, #tpu.memory_space<vmem>>, vector<2x32xf32>
    %cst_6 = arith.constant dense<0.000000e+00> : vector<2x32xf32>
    %7 = tpu.matmul %6, %5, %cst_6 {dimension_numbers = #tpu.dot_dimension_numbers<[1], [1], [0], [0], [0, 0, 1, 0], [], []>} : vector<2x32xf32>, vector<32x32xf32>, vector<2x32xf32> -> vector<2x32xf32>
    %c0_7 = arith.constant 0 : index
    %c0_8 = arith.constant 0 : index
    %c0_9 = arith.constant 0 : index
    %8 = vector.load %arg5[%c0_7, %c0_8, %c0_9] : memref<1x2x32xf32, #tpu.memory_space<vmem>>, vector<1x2x32xf32>
    %9 = vector.shape_cast %8 : vector<1x2x32xf32> to vector<2x32xf32>
    %10 = arith.addf %7, %9 : vector<2x32xf32>
    %c0_10 = arith.constant 0 : index
    %c0_11 = arith.constant 0 : index
    %c0_12 = arith.constant 0 : index
    %11 = vector.load %arg6[%c0_10, %c0_11, %c0_12] : memref<1x16x32xf32, #tpu.memory_space<vmem>>, vector<1x16x32xf32>
    %12 = vector.shape_cast %11 : vector<1x16x32xf32> to vector<16x32xf32>
    %cst_13 = arith.constant 0.000000e+00 : f32
    %13 = vector.broadcast %cst_13 : f32 to vector<16x32xf32>
    %14 = arith.cmpf ogt, %12, %13 : vector<16x32xf32>
    %15 = vector.extract_strided_slice %4 {offsets = [0, 0], sizes = [16, 16], strides = [1, 1]} : vector<16x32xf32> to vector<16x16xf32>
    %16 = vector.extract_strided_slice %5 {offsets = [0, 0], sizes = [32, 16], strides = [1, 1]} : vector<32x32xf32> to vector<32x16xf32>
    %c0_14 = arith.constant 0 : index
    %c0_15 = arith.constant 0 : index
    %17 = vector.load %arg3[%c0_14, %c0_15] : memref<2x16xf32, #tpu.memory_space<vmem>>, vector<1x16xf32>
    %18 = vector.broadcast %17 : vector<1x16xf32> to vector<16x16xf32>
    %19 = arith.mulf %15, %18 : vector<16x16xf32>
    %cst_16 = arith.constant dense<0.000000e+00> : vector<16xf32>
    %20 = vector.multi_reduction <add>, %19, %cst_16 [1] : vector<16x16xf32> to vector<16xf32>
    %21 = vector.shape_cast %20 : vector<16xf32> to vector<16x1xf32>
    %22 = vector.extract_strided_slice %10 {offsets = [0, 0], sizes = [1, 32], strides = [1, 1]} : vector<2x32xf32> to vector<1x32xf32>
    %23 = vector.broadcast %21 : vector<16x1xf32> to vector<16x32xf32>
    %24 = vector.broadcast %22 : vector<1x32xf32> to vector<16x32xf32>
    %25 = arith.addf %23, %24 : vector<16x32xf32>
    %cst_17 = arith.constant 0.000000e+00 : f32
    %26 = vector.broadcast %cst_17 : f32 to vector<16x32xf32>
    %27 = arith.cmpf ogt, %25, %26 : vector<16x32xf32>
    %cst_18 = arith.constant 2.000000e-01 : f32
    %28 = vector.broadcast %cst_18 : f32 to vector<16x32xf32>
    %29 = arith.mulf %28, %25 : vector<16x32xf32>
    %30 = arith.select %27, %25, %29 : vector<16x32xi1>, vector<16x32xf32>
    %cst_19 = arith.constant -3.40282347E+38 : f32
    %31 = vector.broadcast %cst_19 : f32 to vector<16x32xf32>
    %32 = arith.select %14, %30, %31 : vector<16x32xi1>, vector<16x32xf32>
    %cst_20 = arith.constant dense<0xFF800000> : vector<16xf32>
    %33 = vector.multi_reduction <maximumf>, %32, %cst_20 [1] : vector<16x32xf32> to vector<16xf32>
    %34 = vector.shape_cast %33 : vector<16xf32> to vector<16x1xf32>
    %35 = vector.broadcast %34 : vector<16x1xf32> to vector<16x32xf32>
    %36 = arith.subf %32, %35 : vector<16x32xf32>
    %37 = math.exp %36 : vector<16x32xf32>
    %cst_21 = arith.constant 0.000000e+00 : f32
    %38 = vector.broadcast %cst_21 : f32 to vector<16x32xf32>
    %39 = arith.select %14, %37, %38 : vector<16x32xi1>, vector<16x32xf32>
    %cst_22 = arith.constant dense<0.000000e+00> : vector<16xf32>
    %40 = vector.multi_reduction <add>, %39, %cst_22 [1] : vector<16x32xf32> to vector<16xf32>
    %41 = vector.shape_cast %40 : vector<16xf32> to vector<16x1xf32>
    %cst_23 = arith.constant 1.000000e-30 : f32
    %42 = vector.broadcast %cst_23 : f32 to vector<16x1xf32>
    %43 = arith.maximumf %41, %42 : vector<16x1xf32>
    %44 = tpu.reciprocal %43 {approx = true} : vector<16x1xf32> -> vector<16x1xf32>
    %45 = arith.mulf %43, %44 : vector<16x1xf32>
    %cst_24 = arith.constant 2.000000e+00 : f32
    %46 = vector.broadcast %cst_24 : f32 to vector<16x1xf32>
    %47 = arith.subf %46, %45 : vector<16x1xf32>
    %48 = arith.mulf %44, %47 : vector<16x1xf32>
    %49 = vector.broadcast %48 : vector<16x1xf32> to vector<16x32xf32>
    %50 = arith.mulf %39, %49 : vector<16x32xf32>
    %cst_25 = arith.constant dense<0.000000e+00> : vector<16x16xf32>
    %51 = tpu.matmul %50, %16, %cst_25 {dimension_numbers = #tpu.dot_dimension_numbers<[1], [0], [0], [1], [0, 0, 1, 1], [], []>} : vector<16x32xf32>, vector<32x16xf32>, vector<16x16xf32> -> vector<16x16xf32>
    %52 = vector.extract_strided_slice %4 {offsets = [0, 16], sizes = [16, 16], strides = [1, 1]} : vector<16x32xf32> to vector<16x16xf32>
    %53 = vector.extract_strided_slice %5 {offsets = [0, 16], sizes = [32, 16], strides = [1, 1]} : vector<32x32xf32> to vector<32x16xf32>
    %c1 = arith.constant 1 : index
    %c0_26 = arith.constant 0 : index
    %54 = vector.load %arg3[%c1, %c0_26] : memref<2x16xf32, #tpu.memory_space<vmem>>, vector<1x16xf32>
    %55 = vector.broadcast %54 : vector<1x16xf32> to vector<16x16xf32>
    %56 = arith.mulf %52, %55 : vector<16x16xf32>
    %cst_27 = arith.constant dense<0.000000e+00> : vector<16xf32>
    %57 = vector.multi_reduction <add>, %56, %cst_27 [1] : vector<16x16xf32> to vector<16xf32>
    %58 = vector.shape_cast %57 : vector<16xf32> to vector<16x1xf32>
    %59 = vector.extract_strided_slice %10 {offsets = [1, 0], sizes = [1, 32], strides = [1, 1]} : vector<2x32xf32> to vector<1x32xf32>
    %60 = vector.broadcast %58 : vector<16x1xf32> to vector<16x32xf32>
    %61 = vector.broadcast %59 : vector<1x32xf32> to vector<16x32xf32>
    %62 = arith.addf %60, %61 : vector<16x32xf32>
    %cst_28 = arith.constant 0.000000e+00 : f32
    %63 = vector.broadcast %cst_28 : f32 to vector<16x32xf32>
    %64 = arith.cmpf ogt, %62, %63 : vector<16x32xf32>
    %cst_29 = arith.constant 2.000000e-01 : f32
    %65 = vector.broadcast %cst_29 : f32 to vector<16x32xf32>
    %66 = arith.mulf %65, %62 : vector<16x32xf32>
    %67 = arith.select %64, %62, %66 : vector<16x32xi1>, vector<16x32xf32>
    %cst_30 = arith.constant -3.40282347E+38 : f32
    %68 = vector.broadcast %cst_30 : f32 to vector<16x32xf32>
    %69 = arith.select %14, %67, %68 : vector<16x32xi1>, vector<16x32xf32>
    %cst_31 = arith.constant dense<0xFF800000> : vector<16xf32>
    %70 = vector.multi_reduction <maximumf>, %69, %cst_31 [1] : vector<16x32xf32> to vector<16xf32>
    %71 = vector.shape_cast %70 : vector<16xf32> to vector<16x1xf32>
    %72 = vector.broadcast %71 : vector<16x1xf32> to vector<16x32xf32>
    %73 = arith.subf %69, %72 : vector<16x32xf32>
    %74 = math.exp %73 : vector<16x32xf32>
    %cst_32 = arith.constant 0.000000e+00 : f32
    %75 = vector.broadcast %cst_32 : f32 to vector<16x32xf32>
    %76 = arith.select %14, %74, %75 : vector<16x32xi1>, vector<16x32xf32>
    %cst_33 = arith.constant dense<0.000000e+00> : vector<16xf32>
    %77 = vector.multi_reduction <add>, %76, %cst_33 [1] : vector<16x32xf32> to vector<16xf32>
    %78 = vector.shape_cast %77 : vector<16xf32> to vector<16x1xf32>
    %cst_34 = arith.constant 1.000000e-30 : f32
    %79 = vector.broadcast %cst_34 : f32 to vector<16x1xf32>
    %80 = arith.maximumf %78, %79 : vector<16x1xf32>
    %81 = tpu.reciprocal %80 {approx = true} : vector<16x1xf32> -> vector<16x1xf32>
    %82 = arith.mulf %80, %81 : vector<16x1xf32>
    %cst_35 = arith.constant 2.000000e+00 : f32
    %83 = vector.broadcast %cst_35 : f32 to vector<16x1xf32>
    %84 = arith.subf %83, %82 : vector<16x1xf32>
    %85 = arith.mulf %81, %84 : vector<16x1xf32>
    %86 = vector.broadcast %85 : vector<16x1xf32> to vector<16x32xf32>
    %87 = arith.mulf %76, %86 : vector<16x32xf32>
    %cst_36 = arith.constant dense<0.000000e+00> : vector<16x16xf32>
    %88 = tpu.matmul %87, %53, %cst_36 {dimension_numbers = #tpu.dot_dimension_numbers<[1], [0], [0], [1], [0, 0, 1, 1], [], []>} : vector<16x32xf32>, vector<32x16xf32>, vector<16x16xf32> -> vector<16x16xf32>
    %89 = tpu.concatenate %51, %88 in 1 : vector<16x16xf32>, vector<16x16xf32> -> vector<16x32xf32>
    %cst_37 = arith.constant 0.000000e+00 : f32
    %90 = vector.broadcast %cst_37 : f32 to vector<16x32xf32>
    %91 = arith.cmpf ogt, %89, %90 : vector<16x32xf32>
    %cst_38 = arith.constant 0.000000e+00 : f32
    %92 = vector.broadcast %cst_38 : f32 to vector<16x32xf32>
    %93 = arith.minimumf %89, %92 : vector<16x32xf32>
    %94 = math.exp %93 : vector<16x32xf32>
    %cst_39 = arith.constant 1.000000e+00 : f32
    %95 = vector.broadcast %cst_39 : f32 to vector<16x32xf32>
    %96 = arith.subf %94, %95 : vector<16x32xf32>
    %97 = arith.select %91, %89, %96 : vector<16x32xi1>, vector<16x32xf32>
    %c0_40 = arith.constant 0 : index
    %c0_41 = arith.constant 0 : index
    %c0_42 = arith.constant 0 : index
    %98 = vector.load %arg7[%c0_40, %c0_41, %c0_42] : memref<1x16x32xf32, #tpu.memory_space<vmem>>, vector<1x16x32xf32>
    %99 = vector.shape_cast %98 : vector<1x16x32xf32> to vector<16x32xf32>
    %100 = vector.shape_cast %97 : vector<16x32xf32> to vector<1x16x32xf32>
    tpu.vector_store %arg7[%c0_40, %c0_41, %c0_42], %100 {strides = array<i32>} : memref<1x16x32xf32, #tpu.memory_space<vmem>>, vector<1x16x32xf32>,
    return
  }
  func.func @transform_0(%arg0: i32) -> (i32, i32, i32) {
    %c0_i32 = arith.constant 0 : i32
    %c0_i32_0 = arith.constant 0 : i32
    %c0_i32_1 = arith.constant 0 : i32
    return %arg0, %c0_i32, %c0_i32_0 : i32, i32, i32
  }
  func.func @transform_1(%arg0: i32) -> (i32, i32) {
    %c0_i32 = arith.constant 0 : i32
    %c0_i32_0 = arith.constant 0 : i32
    %c0_i32_1 = arith.constant 0 : i32
    return %c0_i32, %c0_i32_0 : i32, i32
  }
  func.func @transform_2(%arg0: i32) -> (i32, i32) {
    %c0_i32 = arith.constant 0 : i32
    %c0_i32_0 = arith.constant 0 : i32
    %c0_i32_1 = arith.constant 0 : i32
    return %c0_i32, %c0_i32_0 : i32, i32
  }
  func.func @transform_3(%arg0: i32) -> (i32, i32) {
    %c0_i32 = arith.constant 0 : i32
    %c0_i32_0 = arith.constant 0 : i32
    %c0_i32_1 = arith.constant 0 : i32
    return %c0_i32, %c0_i32_0 : i32, i32
  }
  func.func @transform_4(%arg0: i32) -> (i32, i32, i32) {
    %c0_i32 = arith.constant 0 : i32
    %c0_i32_0 = arith.constant 0 : i32
    %c0_i32_1 = arith.constant 0 : i32
    return %arg0, %c0_i32, %c0_i32_0 : i32, i32, i32
  }
  func.func @transform_5(%arg0: i32) -> (i32, i32, i32) {
    %c0_i32 = arith.constant 0 : i32
    %c0_i32_0 = arith.constant 0 : i32
    %c0_i32_1 = arith.constant 0 : i32
    return %arg0, %c0_i32, %c0_i32_0 : i32, i32, i32
  }
  func.func @transform_6(%arg0: i32) -> (i32, i32, i32) {
    %c0_i32 = arith.constant 0 : i32
    %c0_i32_0 = arith.constant 0 : i32
    %c0_i32_1 = arith.constant 0 : i32
    return %arg0, %c0_i32, %c0_i32_0 : i32, i32, i32
  }
}

</mosaic_0001>

<llo_original>
// kernel: tpu_custom_call.1
$region0: #{tpu_custom_call.1}
  #allocation0 [shape = 'u32[]', space=smem, size = 0x4, offset = 0x4, fixed_abs, tag = 'smem constant byte address 0x4 - core index']
  #allocation1 [shape = 'u32[144,128]{1,0:T(1,128)}', space=vmem, size = 0x12000, scoped, tag = 'internal scratch']
  %s0 = inlined_call_operand.vmem [shape: f32[3,48,32], index: 0, kind: input, shape index: {}]
  %s1 = inlined_call_operand.vmem [shape: f32[32,32], index: 1, kind: input, shape index: {}]
  %s2 = inlined_call_operand.vmem [shape: f32[2,16], index: 2, kind: input, shape index: {}]
  %s3 = inlined_call_operand.vmem [shape: f32[2,32], index: 3, kind: input, shape index: {}]
  %s4 = inlined_call_operand.vmem [shape: f32[3,2,32], index: 4, kind: input, shape index: {}]
  %s5 = inlined_call_operand.vmem [shape: f32[3,16,32], index: 5, kind: input, shape index: {}]
  %s6 = inlined_call_operand.hbm [shape: f32[3,16,32], index: 6, kind: output, shape index: {}]
  %s7 = sld [smem:[#allocation0]]
  $region57: #{tpu_custom_call.1} parent=0
    _
  %s9 = ssub.s32 1, %s7
  %s10 = scalar_select 0, %s9, %s7
  $region1: #{tpu_custom_call.1} parent=0
    #allocation2 [shape = 'u8[16384]{0}', space=vmem, size = 0x4000, scoped, tag = 'output window, operand 0']
    #allocation3 [shape = 's32[2]{0}', space=sflag, size = 0x8, scoped, tag = 'scoped memory for tpu_custom_call.1']
    %11 = vsyncpa [#allocation3], 0
    %s12 = scalar_lea.sflag [#allocation3], 1
    %13 = vsyncpa %s12, 0
    loop: start=0, step=1, limit=5
    $region2: #{tpu_custom_call.1} parent=1 // loop_pre_header
      _
    $region3: #{tpu_custom_call.1} parent=1 // loop_header
      %s15 = sphi 0, %s19
      %p16 = scmp.ge.s32.totalorder %s15, 5
      %s25 = sphi 0, %s27
      %s28 = sphi 0, %s25
      %s29 = sphi 0, %s28
      %s45 = sphi 0, %s29
      %s49 = sphi 0, %s49
      %s51 = sphi 0, %s49
      %s52 = sphi 0, %s51
      %s66 = sphi 0, %s52
      %s70 = sphi 0, %s70
      %s72 = sphi 0, %s70
      %s73 = sphi 0, %s72
      %s87 = sphi 0, %s73
      %s91 = sphi 0, %s91
      %s93 = sphi 0, %s91
      %s94 = sphi 0, %s93
      %s108 = sphi 0, %s94
      %s114 = sphi 0, %s116
      %s117 = sphi 0, %s114
      %s118 = sphi 0, %s117
      %s134 = sphi 0, %s118
      %s140 = sphi 0, %s142
      %s143 = sphi 0, %s140
      %s144 = sphi 0, %s143
      %s160 = sphi 0, %s144
      %s166 = sphi 0, %s168
      %s169 = sphi 0, %s166
      %s170 = sphi 0, %s169
      %s186 = sphi 0, %s170
    $region4: #{tpu_custom_call.1} parent=1 // loop_header_branch
      %18 = sbr.rel (%p16) target = $region8
    $region5: #{tpu_custom_call.1} parent=1 // loop_body
      %s20 = ssub.s32 %s15, 1
      %s21 = ssub.s32 %s15, 2
      %s22 = sadd.s32 %s15, 1
      %s23 = ssub.s32 %s15, %s22
      %p24 = scmp.eq.s32.totalorder %s23, 0
      %s26 = sadd.s32 %s25, 1
      %s27 = scalar_select %p24, %s25, %s26
      %p30 = pneg %p24
      %p31 = scmp.eq.s32.totalorder %s15, 2
      %p32 = por %p30, %p31
      %p33 = scmp.ne.s32.totalorder %s25, %s28
      %p34 = scmp.eq.s32.totalorder %s15, 0
      %p35 = por %p33, %p34
      %p36 = scmp.ne.s32.totalorder %s25, %s28
      %p37 = scmp.eq.s32.totalorder %s20, 2
      %p38 = por %p36, %p37
      %p39 = scmp.ne.s32.totalorder %s28, %s29
      %p40 = scmp.eq.s32.totalorder %s20, 0
      %p41 = por %p39, %p40
      %p42 = scmp.ne.s32.totalorder %s28, %s29
      %p43 = scmp.eq.s32.totalorder %s21, 2
      %p44 = por %p42, %p43
      %p46 = scmp.ne.s32.totalorder %s29, %s45
      %p47 = scmp.eq.s32.totalorder %s21, 0
      %p48 = por %p46, %p47
      %s50 = sadd.s32 %s49, 1
      %p53 = scmp.eq.s32.totalorder %s15, 2
      %p54 = scmp.ne.s32.totalorder %s49, %s51
      %p55 = scmp.eq.s32.totalorder %s15, 0
      %p56 = por %p54, %p55
      %p57 = scmp.ne.s32.totalorder %s49, %s51
      %p58 = scmp.eq.s32.totalorder %s20, 2
      %p59 = por %p57, %p58
      %p60 = scmp.ne.s32.totalorder %s51, %s52
      %p61 = scmp.eq.s32.totalorder %s20, 0
      %p62 = por %p60, %p61
      %p63 = scmp.ne.s32.totalorder %s51, %s52
      %p64 = scmp.eq.s32.totalorder %s21, 2
      %p65 = por %p63, %p64
      %p67 = scmp.ne.s32.totalorder %s52, %s66
      %p68 = scmp.eq.s32.totalorder %s21, 0
      %p69 = por %p67, %p68
      %s71 = sadd.s32 %s70, 1
      %p74 = scmp.eq.s32.totalorder %s15, 2
      %p75 = scmp.ne.s32.totalorder %s70, %s72
      %p76 = scmp.eq.s32.totalorder %s15, 0
      %p77 = por %p75, %p76
      %p78 = scmp.ne.s32.totalorder %s70, %s72
      %p79 = scmp.eq.s32.totalorder %s20, 2
      %p80 = por %p78, %p79
      %p81 = scmp.ne.s32.totalorder %s72, %s73
      %p82 = scmp.eq.s32.totalorder %s20, 0
      %p83 = por %p81, %p82
      %p84 = scmp.ne.s32.totalorder %s72, %s73
      %p85 = scmp.eq.s32.totalorder %s21, 2
      %p86 = por %p84, %p85
      %p88 = scmp.ne.s32.totalorder %s73, %s87
      %p89 = scmp.eq.s32.totalorder %s21, 0
      %p90 = por %p88, %p89
      %s92 = sadd.s32 %s91, 1
      %p95 = scmp.eq.s32.totalorder %s15, 2
      %p96 = scmp.ne.s32.totalorder %s91, %s93
      %p97 = scmp.eq.s32.totalorder %s15, 0
      %p98 = por %p96, %p97
      %p99 = scmp.ne.s32.totalorder %s91, %s93
      %p100 = scmp.eq.s32.totalorder %s20, 2
      %p101 = por %p99, %p100
      %p102 = scmp.ne.s32.totalorder %s93, %s94
      %p103 = scmp.eq.s32.totalorder %s20, 0
      %p104 = por %p102, %p103
      %p105 = scmp.ne.s32.totalorder %s93, %s94
      %p106 = scmp.eq.s32.totalorder %s21, 2
      %p107 = por %p105, %p106
      %p109 = scmp.ne.s32.totalorder %s94, %s108
      %p110 = scmp.eq.s32.totalorder %s21, 0
      %p111 = por %p109, %p110
      %s112 = ssub.s32 %s15, %s22
      %p113 = scmp.eq.s32.totalorder %s112, 0
      %s115 = sadd.s32 %s114, 1
      %s116 = scalar_select %p113, %s114, %s115
      %p119 = pneg %p113
      %p120 = scmp.eq.s32.totalorder %s15, 2
      %p121 = por %p119, %p120
      %p122 = scmp.ne.s32.totalorder %s114, %s117
      %p123 = scmp.eq.s32.totalorder %s15, 0
      %p124 = por %p122, %p123
      %p125 = scmp.ne.s32.totalorder %s114, %s117
      %p126 = scmp.eq.s32.totalorder %s20, 2
      %p127 = por %p125, %p126
      %p128 = scmp.ne.s32.totalorder %s117, %s118
      %p129 = scmp.eq.s32.totalorder %s20, 0
      %p130 = por %p128, %p129
      %p131 = scmp.ne.s32.totalorder %s117, %s118
      %p132 = scmp.eq.s32.totalorder %s21, 2
      %p133 = por %p131, %p132
      %p135 = scmp.ne.s32.totalorder %s118, %s134
      %p136 = scmp.eq.s32.totalorder %s21, 0
      %p137 = por %p135, %p136
      %s138 = ssub.s32 %s15, %s22
      %p139 = scmp.eq.s32.totalorder %s138, 0
      %s141 = sadd.s32 %s140, 1
      %s142 = scalar_select %p139, %s140, %s141
      %p145 = pneg %p139
      %p146 = scmp.eq.s32.totalorder %s15, 2
      %p147 = por %p145, %p146
      %p148 = scmp.ne.s32.totalorder %s140, %s143
      %p149 = scmp.eq.s32.totalorder %s15, 0
      %p150 = por %p148, %p149
      %p151 = scmp.ne.s32.totalorder %s140, %s143
      %p152 = scmp.eq.s32.totalorder %s20, 2
      %p153 = por %p151, %p152
      %p154 = scmp.ne.s32.totalorder %s143, %s144
      %p155 = scmp.eq.s32.totalorder %s20, 0
      %p156 = por %p154, %p155
      %p157 = scmp.ne.s32.totalorder %s143, %s144
      %p158 = scmp.eq.s32.totalorder %s21, 2
      %p159 = por %p157, %p158
      %p161 = scmp.ne.s32.totalorder %s144, %s160
      %p162 = scmp.eq.s32.totalorder %s21, 0
      %p163 = por %p161, %p162
      %s164 = ssub.s32 %s15, %s22
      %p165 = scmp.eq.s32.totalorder %s164, 0
      %s167 = sadd.s32 %s166, 1
      %s168 = scalar_select %p165, %s166, %s167
      %p171 = pneg %p165
      %p172 = scmp.eq.s32.totalorder %s15, 2
      %p173 = por %p171, %p172
      %p174 = scmp.ne.s32.totalorder %s166, %s169
      %p175 = scmp.eq.s32.totalorder %s15, 0
      %p176 = por %p174, %p175
      %p177 = scmp.ne.s32.totalorder %s166, %s169
      %p178 = scmp.eq.s32.totalorder %s20, 2
      %p179 = por %p177, %p178
      %p180 = scmp.ne.s32.totalorder %s169, %s170
      %p181 = scmp.eq.s32.totalorder %s20, 0
      %p182 = por %p180, %p181
      %p183 = scmp.ne.s32.totalorder %s169, %s170
      %p184 = scmp.eq.s32.totalorder %s21, 2
      %p185 = por %p183, %p184
      %p187 = scmp.ne.s32.totalorder %s170, %s186
      %p188 = scmp.eq.s32.totalorder %s21, 0
      %p189 = por %p187, %p188
      %p190 = scmp.le.s32.totalorder 1, %s15
      %p191 = scmp.lt.s32.totalorder %s15, 4
      %p192 = pnand %p190, %p191
      %p193 = pneg %p192
      // Predicated region
      $region9: #{tpu_custom_call.1} parent=5 // pred_check
        _
      $region10: #{tpu_custom_call.1} parent=5 // pred_check_branch
        %195 = sbr.rel (%p192) target = $region12
      $region11: #{tpu_custom_call.1} parent=5 // pred_region
        %s196 = ssub.s32 %s15, 1
        // Predicated region
        $region13: #{tpu_custom_call.1} parent=11 // pred_check
          %p197 = pneg %p62
        $region14: #{tpu_custom_call.1} parent=11 // pred_check_branch
          %199 = sbr.rel (%p197) target = $region16
        $region15: #{tpu_custom_call.1} parent=11 // pred_region
          _
        $region16: #{tpu_custom_call.1} parent=11 // pred_fallthru
          _
        // Predicated region
        $region17: #{tpu_custom_call.1} parent=11 // pred_check
          %p200 = pneg %p83
        $region18: #{tpu_custom_call.1} parent=11 // pred_check_branch
          %202 = sbr.rel (%p200) target = $region20
        $region19: #{tpu_custom_call.1} parent=11 // pred_region
          _
        $region20: #{tpu_custom_call.1} parent=11 // pred_fallthru
          _
        // Predicated region
        $region21: #{tpu_custom_call.1} parent=11 // pred_check
          %p203 = pneg %p104
        $region22: #{tpu_custom_call.1} parent=11 // pred_check_branch
          %205 = sbr.rel (%p203) target = $region24
        $region23: #{tpu_custom_call.1} parent=11 // pred_region
          _
        $region24: #{tpu_custom_call.1} parent=11 // pred_fallthru
          _
      $region12: #{tpu_custom_call.1} parent=5 // pred_fallthru
        _
      %p206 = scmp.lt.s32.totalorder %s15, 3
      // Predicated region
      $region25: #{tpu_custom_call.1} parent=5 // pred_check
        %p207 = pneg %p206
      $region26: #{tpu_custom_call.1} parent=5 // pred_check_branch
        %209 = sbr.rel (%p207) target = $region28
      $region27: #{tpu_custom_call.1} parent=5 // pred_region
        // Predicated region
        $region29: #{tpu_custom_call.1} parent=27 // pred_check
          %p210 = pneg %p35
        $region30: #{tpu_custom_call.1} parent=27 // pred_check_branch
          %212 = sbr.rel (%p210) target = $region32
        $region31: #{tpu_custom_call.1} parent=27 // pred_region
          %p213 = scmp.lt.s32.totalorder %s15, 2
          %s214 = scalar_select %p213, %s15, 2
          %s215 = smul.addr %s214, 6
          %s216 = smul.addr %s215, 8
          %s217 = scalar_lea.vmem %s0, %s216
        $region32: #{tpu_custom_call.1} parent=27 // pred_fallthru
          _
        // Predicated region
        $region33: #{tpu_custom_call.1} parent=27 // pred_check
          %p218 = pneg %p124
        $region34: #{tpu_custom_call.1} parent=27 // pred_check_branch
          %220 = sbr.rel (%p218) target = $region36
        $region35: #{tpu_custom_call.1} parent=27 // pred_region
          %p221 = scmp.lt.s32.totalorder %s15, 2
          %s222 = scalar_select %p221, %s15, 2
          %s223 = smul.addr %s222, 2
          %s224 = scalar_lea.vmem %s4, %s223
        $region36: #{tpu_custom_call.1} parent=27 // pred_fallthru
          _
        // Predicated region
        $region37: #{tpu_custom_call.1} parent=27 // pred_check
          %p225 = pneg %p150
        $region38: #{tpu_custom_call.1} parent=27 // pred_check_branch
          %227 = sbr.rel (%p225) target = $region40
        $region39: #{tpu_custom_call.1} parent=27 // pred_region
          %p228 = scmp.lt.s32.totalorder %s15, 2
          %s229 = scalar_select %p228, %s15, 2
          %s230 = smul.addr %s229, 2
          %s231 = smul.addr %s230, 8
          %s232 = scalar_lea.vmem %s5, %s231
        $region40: #{tpu_custom_call.1} parent=27 // pred_fallthru
          _
      $region28: #{tpu_custom_call.1} parent=5 // pred_fallthru
        _
      %p233 = scmp.le.s32.totalorder 1, %s15
      %p234 = scmp.lt.s32.totalorder %s15, 4
      %p235 = pnand %p233, %p234
      %p236 = pneg %p235
      // Predicated region
      $region41: #{tpu_custom_call.1} parent=5 // pred_check
        _
      $region42: #{tpu_custom_call.1} parent=5 // pred_check_branch
        %238 = sbr.rel (%p235) target = $region44
      $region43: #{tpu_custom_call.1} parent=5 // pred_region
        %s239 = ssub.s32 %s15, 1
        %p240 = scmp.lt.s32.totalorder %s20, 2
        %s241 = scalar_select %p240, %s20, 2
        %s242 = smul.addr %s241, 6
        %s243 = smul.addr %s242, 8
        %s244 = scalar_lea.vmem %s0, %s243
        %p245 = pneg %p41
        %p246 = pneg %p38
        %p247 = pneg %p62
        %p248 = pneg %p59
        %p249 = pneg %p83
        %p250 = pneg %p80
        %p251 = pneg %p104
        %p252 = pneg %p101
        %p253 = scmp.lt.s32.totalorder %s20, 2
        %s254 = scalar_select %p253, %s20, 2
        %s255 = smul.addr %s254, 2
        %s256 = scalar_lea.vmem %s4, %s255
        %p257 = pneg %p130
        %p258 = pneg %p127
        %p259 = scmp.lt.s32.totalorder %s20, 2
        %s260 = scalar_select %p259, %s20, 2
        %s261 = smul.addr %s260, 2
        %s262 = smul.addr %s261, 8
        %s263 = scalar_lea.vmem %s5, %s262
        %p264 = pneg %p156
        %p265 = pneg %p153
        %p266 = pneg %p182
        %p267 = pneg %p179
        %s268 = sand.u32 %s169, 1
        %s269 = scalar_lea.sflag [#allocation3], %s268
        %s270 = sand.u32 %s169, 1
        %s271 = smul.addr %s270, 16
        %s272 = scalar_lea.vmem [#allocation2], %s271
        %p273 = scmp.lt.s32.totalorder %s20, 2
        %s274 = scalar_select %p273, %s20, 2
        %s275 = smul.addr %s274, 6
        %s276 = smul.addr %s275, 8
        %s277 = scalar_lea.vmem %s0, %s276
        %p278 = scmp.lt.s32.totalorder %s20, 2
        %s279 = scalar_select %p278, %s20, 2
        %s280 = smul.addr %s279, 2
        %s281 = scalar_lea.vmem %s4, %s280
        %p282 = scmp.lt.s32.totalorder %s20, 2
        %s283 = scalar_select %p282, %s20, 2
        %s284 = smul.addr %s283, 2
        %s285 = smul.addr %s284, 8
        %s286 = scalar_lea.vmem %s5, %s285
        %v287 = vld [vmem:[%s277] sm:$0xff]
        %v288 = vld [vmem:[%s277 + $0x8] sm:$0xff]
        %v289 = vld [vmem:[%s277 + $0x10] sm:$0xff]
        %v290 = vld [vmem:[%s277 + $0x18] sm:$0xff]
        %v291 = vld [vmem:[%s277 + $0x20] sm:$0xff]
        %v292 = vld [vmem:[%s277 + $0x28] sm:$0xff]
        %v293 = vld [vmem:[%s1] sm:$0xff]
        %v294 = vld [vmem:[%s1 + $0x8] sm:$0xff]
        %v295 = vld [vmem:[%s1 + $0x10] sm:$0xff]
        %v296 = vld [vmem:[%s1 + $0x18] sm:$0xff]
        %vm297 = vcmask 261120
        %v299 = vsel %vm297, %v287, 0
        %v302 = vsel %vm297, %v288, 0
        %v305 = vsel %vm297, %v289, 0
        %v308 = vsel %vm297, %v290, 0
        %v311 = vsel %vm297, %v291, 0
        %v314 = vsel %vm297, %v292, 0
        %316 = vmatprep.subr.mxu0 0.0
        %317 = vmatpush1.msra.mxu0 %v293
        %318 = vmatprep.subr.mxu0 0.0
        %319 = vmatpush1.msra.mxu0 %v294
        %320 = vmatprep.subr.mxu0 0.0
        %321 = vmatpush1.msra.mxu0 %v295
        %322 = vmatprep.subr.mxu0 0.0
        %323 = vmatpush1.msra.mxu0 %v296
        %324 = vmatprep.subr.mxu0 0.0
        %325 = vmatpush1.msra.mxu0 0.0
        %326 = vmatprep.subr.mxu0 0.0
        %327 = vmatpush1.msra.mxu0 0.0
        %328 = vmatprep.subr.mxu0 0.0
        %329 = vmatpush1.msra.mxu0 0.0
        %330 = vmatprep.subr.mxu0 0.0
        %331 = vmatpush1.msra.mxu0 0.0
        %332 = vmatprep.subr.mxu0 0.0
        %333 = vmatpush1.msra.mxu0 0.0
        %334 = vmatprep.subr.mxu0 0.0
        %335 = vmatpush1.msra.mxu0 0.0
        %336 = vmatprep.subr.mxu0 0.0
        %337 = vmatpush1.msra.mxu0 0.0
        %338 = vmatprep.subr.mxu0 0.0
        %339 = vmatpush1.msra.mxu0 0.0
        %340 = vmatprep.subr.mxu0 0.0
        %341 = vmatpush1.msra.mxu0 0.0
        %342 = vmatprep.subr.mxu0 0.0
        %343 = vmatpush1.msra.mxu0 0.0
        %344 = vmatprep.subr.mxu0 0.0
        %345 = vmatpush1.msra.mxu0 0.0
        %346 = vmatprep.subr.mxu0 0.0
        %347 = vmatpush1.msra.mxu0 0.0
        %348 = vmatprep.subr.mxu0 0.0
        %349 = vmatpush1.msra.mxu0 0.0
        %350 = vmatprep.subr.mxu0 0.0
        %351 = vmatpush1.msra.mxu0 0.0
        %352 = vmatprep.subr.mxu0 0.0
        %353 = vmatpush1.msra.mxu0 0.0
        %354 = vmatprep.subr.mxu0 0.0
        %355 = vmatpush1.msra.mxu0 0.0
        %356 = vmatprep.subr.mxu0 0.0
        %357 = vmatpush1.msra.mxu0 0.0
        %358 = vmatprep.subr.mxu0 0.0
        %359 = vmatpush1.msra.mxu0 0.0
        %360 = vmatprep.subr.mxu0 0.0
        %361 = vmatpush1.msra.mxu0 0.0
        %362 = vmatprep.subr.mxu0 0.0
        %363 = vmatpush1.msra.mxu0 0.0
        %364 = vmatprep.subr.mxu0 0.0
        %365 = vmatpush1.msra.mxu0 0.0
        %366 = vmatprep.subr.mxu0 0.0
        %367 = vmatpush1.msra.mxu0 0.0
        %368 = vmatprep.subr.mxu0 0.0
        %369 = vmatpush1.msra.mxu0 0.0
        %370 = vmatprep.subr.mxu0 0.0
        %371 = vmatpush1.msra.mxu0 0.0
        %372 = vmatprep.subr.mxu0 0.0
        %373 = vmatpush1.msra.mxu0 0.0
        %374 = vmatprep.subr.mxu0 0.0
        %375 = vmatpush1.msra.mxu0 0.0
        %376 = vmatprep.subr.mxu0 0.0
        %377 = vmatpush1.msra.mxu0 0.0
        %378 = vmatprep.subr.mxu0 0.0
        %379 = vmatpush1.msra.mxu0 0.0
        %380 = vmatprep.mubr.f32.mxu0 0.0
        %381 = vmatmul.mubr.f32.gmra.mrb[0].mxu0 %v299
        %v382 = vpop.f32.mrb[0].mxu0
        %v383 = vadd.f32 0.0, %v382
        %v384 = vpop.f32.mrb[0].mxu0
        %385 = vmatprep.mubr.f32.mxu0 0.0
        %386 = vmatmul.mubr.f32.gmra.mrb[0].mxu0 %v302
        %v387 = vpop.f32.mrb[0].mxu0
        %v388 = vadd.f32 0.0, %v387
        %v389 = vpop.f32.mrb[0].mxu0
        %390 = vmatprep.mubr.f32.mxu0 0.0
        %391 = vmatmul.mubr.f32.gmra.mrb[0].mxu0 %v305
        %v392 = vpop.f32.mrb[0].mxu0
        %v393 = vadd.f32 0.0, %v392
        %v394 = vpop.f32.mrb[0].mxu0
        %395 = vmatprep.mubr.f32.mxu0 0.0
        %396 = vmatmul.mubr.f32.gmra.mrb[0].mxu0 %v308
        %v397 = vpop.f32.mrb[0].mxu0
        %v398 = vadd.f32 0.0, %v397
        %v399 = vpop.f32.mrb[0].mxu0
        %400 = vmatprep.mubr.f32.mxu0 0.0
        %401 = vmatmul.mubr.f32.gmra.mrb[0].mxu0 %v311
        %v402 = vpop.f32.mrb[0].mxu0
        %v403 = vadd.f32 0.0, %v402
        %v404 = vpop.f32.mrb[0].mxu0
        %405 = vmatprep.mubr.f32.mxu0 0.0
        %406 = vmatmul.mubr.f32.gmra.mrb[0].mxu0 %v314
        %v407 = vpop.f32.mrb[0].mxu0
        %v408 = vadd.f32 0.0, %v407
        %v409 = vpop.f32.mrb[0].mxu0
        %410 = vdwg.mxu0
        %v411 = vld [vmem:[%s3] sm:$0x3]
        %v412 = vld [vmem:[%s281] sm:$0x3]
        %v414 = vsel %vm297, %v411, 0
        %v417 = vsel %vm297, %v393, 0
        %v420 = vsel %vm297, %v398, 0
        %v423 = vsel %vm297, %v403, 0
        %v426 = vsel %vm297, %v408, 0
        %428 = vmatprep.subr.mxu0 0.0
        %429 = vmatpush1.xpose.msra.mxu0 %v417
        %430 = vmatprep.subr.mxu0 0.0
        %431 = vmatpush1.xpose.msra.mxu0 %v420
        %432 = vmatprep.subr.mxu0 0.0
        %433 = vmatpush1.xpose.msra.mxu0 %v423
        %434 = vmatprep.subr.mxu0 0.0
        %435 = vmatpush1.xpose.msra.mxu0 %v426
        %436 = vmatprep.subr.mxu0 0.0
        %437 = vmatpush1.xpose.msra.mxu0 0.0
        %438 = vmatprep.subr.mxu0 0.0
        %439 = vmatpush1.xpose.msra.mxu0 0.0
        %440 = vmatprep.subr.mxu0 0.0
        %441 = vmatpush1.xpose.msra.mxu0 0.0
        %442 = vmatprep.subr.mxu0 0.0
        %443 = vmatpush1.xpose.msra.mxu0 0.0
        %444 = vmatprep.subr.mxu0 0.0
        %445 = vmatpush1.xpose.msra.mxu0 0.0
        %446 = vmatprep.subr.mxu0 0.0
        %447 = vmatpush1.xpose.msra.mxu0 0.0
        %448 = vmatprep.subr.mxu0 0.0
        %449 = vmatpush1.xpose.msra.mxu0 0.0
        %450 = vmatprep.subr.mxu0 0.0
        %451 = vmatpush1.xpose.msra.mxu0 0.0
        %452 = vmatprep.subr.mxu0 0.0
        %453 = vmatpush1.xpose.msra.mxu0 0.0
        %454 = vmatprep.subr.mxu0 0.0
        %455 = vmatpush1.xpose.msra.mxu0 0.0
        %456 = vmatprep.subr.mxu0 0.0
        %457 = vmatpush1.xpose.msra.mxu0 0.0
        %458 = vmatprep.subr.mxu0 0.0
        %459 = vmatpush1.xpose.msra.mxu0 0.0
        %460 = vmatprep.subr.mxu0 0.0
        %461 = vmatpush1.xpose.msra.mxu0 0.0
        %462 = vmatprep.subr.mxu0 0.0
        %463 = vmatpush1.xpose.msra.mxu0 0.0
        %464 = vmatprep.subr.mxu0 0.0
        %465 = vmatpush1.xpose.msra.mxu0 0.0
        %466 = vmatprep.subr.mxu0 0.0
        %467 = vmatpush1.xpose.msra.mxu0 0.0
        %468 = vmatprep.subr.mxu0 0.0
        %469 = vmatpush1.xpose.msra.mxu0 0.0
        %470 = vmatprep.subr.mxu0 0.0
        %471 = vmatpush1.xpose.msra.mxu0 0.0
        %472 = vmatprep.subr.mxu0 0.0
        %473 = vmatpush1.xpose.msra.mxu0 0.0
        %474 = vmatprep.subr.mxu0 0.0
        %475 = vmatpush1.xpose.msra.mxu0 0.0
        %476 = vmatprep.subr.mxu0 0.0
        %477 = vmatpush1.xpose.msra.mxu0 0.0
        %478 = vmatprep.subr.mxu0 0.0
        %479 = vmatpush1.xpose.msra.mxu0 0.0
        %480 = vmatprep.subr.mxu0 0.0
        %481 = vmatpush1.xpose.msra.mxu0 0.0
        %482 = vmatprep.subr.mxu0 0.0
        %483 = vmatpush1.xpose.msra.mxu0 0.0
        %484 = vmatprep.subr.mxu0 0.0
        %485 = vmatpush1.xpose.msra.mxu0 0.0
        %486 = vmatprep.subr.mxu0 0.0
        %487 = vmatpush1.xpose.msra.mxu0 0.0
        %488 = vmatprep.subr.mxu0 0.0
        %489 = vmatpush1.xpose.msra.mxu0 0.0
        %490 = vmatprep.subr.mxu0 0.0
        %491 = vmatpush1.xpose.msra.mxu0 0.0
        %492 = vmatprep.mubr.f32.mxu0 0.0
        %493 = vmatmul.mubr.f32.gmra.mrb[0].mxu0 %v414
        %v494 = vpop.f32.mrb[0].mxu0
        %v495 = vadd.f32 %v412, %v494
        %v496 = vpop.f32.mrb[0].mxu0
        %497 = vdwg.mxu0
        %v498 = vld [vmem:[%s286] sm:$0xff]
        %v499 = vld [vmem:[%s286 + $0x8] sm:$0xff]
        %vm500 = vcmp.gt.f32.partialorder %v498, 0.0
        %vm501 = vcmp.gt.f32.partialorder %v499, 0.0
        %v502 = vld [vmem:[%s2] sm:$0x1]
        %v503 = vlaneseq
        %v504 = vshrl.u32 %v503, 7
        %v505 = vsub.s32 0, %v504
        %v506 = vrot.slane %v502, %v505
        %v507 = vmul.f32 %v383, %v506
        %v508 = vmul.f32 %v388, %v506
        %vm509 = vcmask 130048
        %v510 = vsel %vm509, %v507, 0.0
        %511 = vadd.xlane.f32.xlu0 %v510
        %v512 = vpop.xlane.xlu0 %511
        %v513 = vsel %vm509, %v508, 0.0
        %514 = vadd.xlane.f32.xlu0 %v513
        %v515 = vpop.xlane.xlu0 %514
        %v516 = vlaneseq
        %v517 = vshrl.u32 %v516, 7
        %v518 = vsub.s32 0, %v517
        %v519 = vrot.slane %v495, %v518
        %v520 = vadd.f32 %v512, %v519
        %v521 = vadd.f32 %v515, %v519
        %vm522 = vcmp.gt.f32.partialorder %v520, 0.0
        %vm523 = vcmp.gt.f32.partialorder %v521, 0.0
        %v524 = vmul.f32 %v520, 0.2
        %v525 = vmul.f32 %v521, 0.2
        %v526 = vsel %vm522, %v520, %v524
        %v527 = vsel %vm523, %v521, %v525
        %v528 = vsel %vm500, %v526, -3.4028235e+38
        %v529 = vsel %vm501, %v527, -3.4028235e+38
        %v530 = vsel %vm297, %v528, -inf
        %531 = vmax.xlane.f32.xlu0 %v530
        %v532 = vpop.xlane.xlu0 %531
        %v533 = vsel %vm297, %v529, -inf
        %534 = vmax.xlane.f32.xlu0 %v533
        %v535 = vpop.xlane.xlu0 %534
        %v536 = vsub.f32 %v528, %v532
        %v537 = vsub.f32 %v529, %v535
        %v538 = vmul.f32 %v536, 1.442695
        %v539 = vpow.pop %v538
        %v540 = vmul.f32 %v537, 1.442695
        %v541 = vpow.pop %v540
        %v542 = vsel %vm500, %v539, 0.0
        %v543 = vsel %vm501, %v541, 0.0
        %v544 = vsel %vm297, %v542, 0.0
        %545 = vadd.xlane.f32.xlu0 %v544
        %v546 = vpop.xlane.xlu0 %545
        %v547 = vsel %vm297, %v543, 0.0
        %548 = vadd.xlane.f32.xlu0 %v547
        %v549 = vpop.xlane.xlu0 %548
        %v550 = vmax.f32 %v546, 1e-30
        %v551 = vmax.f32 %v549, 1e-30
        %v552 = vrcp.pop %v550
        %v553 = vrcp.pop %v551
        %v554 = vmul.f32 %v550, %v552
        %v555 = vmul.f32 %v551, %v553
        %v556 = vsub.f32 2.0, %v554
        %v557 = vsub.f32 2.0, %v555
        %v558 = vmul.f32 %v552, %v556
        %v559 = vmul.f32 %v553, %v557
        %v560 = vmul.f32 %v542, %v558
        %v561 = vmul.f32 %v543, %v559
        %v563 = vsel %vm297, %v560, 0
        %v566 = vsel %vm297, %v561, 0
        %568 = vmatprep.subr.mxu0 0.0
        %569 = vmatpush1.msra.mxu0 %v393
        %570 = vmatprep.subr.mxu0 0.0
        %571 = vmatpush1.msra.mxu0 %v398
        %572 = vmatprep.subr.mxu0 0.0
        %573 = vmatpush1.msra.mxu0 %v403
        %574 = vmatprep.subr.mxu0 0.0
        %575 = vmatpush1.msra.mxu0 %v408
        %576 = vmatprep.subr.mxu0 0.0
        %577 = vmatpush1.msra.mxu0 0.0
        %578 = vmatprep.subr.mxu0 0.0
        %579 = vmatpush1.msra.mxu0 0.0
        %580 = vmatprep.subr.mxu0 0.0
        %581 = vmatpush1.msra.mxu0 0.0
        %582 = vmatprep.subr.mxu0 0.0
        %583 = vmatpush1.msra.mxu0 0.0
        %584 = vmatprep.subr.mxu0 0.0
        %585 = vmatpush1.msra.mxu0 0.0
        %586 = vmatprep.subr.mxu0 0.0
        %587 = vmatpush1.msra.mxu0 0.0
        %588 = vmatprep.subr.mxu0 0.0
        %589 = vmatpush1.msra.mxu0 0.0
        %590 = vmatprep.subr.mxu0 0.0
        %591 = vmatpush1.msra.mxu0 0.0
        %592 = vmatprep.subr.mxu0 0.0
        %593 = vmatpush1.msra.mxu0 0.0
        %594 = vmatprep.subr.mxu0 0.0
        %595 = vmatpush1.msra.mxu0 0.0
        %596 = vmatprep.subr.mxu0 0.0
        %597 = vmatpush1.msra.mxu0 0.0
        %598 = vmatprep.subr.mxu0 0.0
        %599 = vmatpush1.msra.mxu0 0.0
        %600 = vmatprep.subr.mxu0 0.0
        %601 = vmatpush1.msra.mxu0 0.0
        %602 = vmatprep.subr.mxu0 0.0
        %603 = vmatpush1.msra.mxu0 0.0
        %604 = vmatprep.subr.mxu0 0.0
        %605 = vmatpush1.msra.mxu0 0.0
        %606 = vmatprep.subr.mxu0 0.0
        %607 = vmatpush1.msra.mxu0 0.0
        %608 = vmatprep.subr.mxu0 0.0
        %609 = vmatpush1.msra.mxu0 0.0
        %610 = vmatprep.subr.mxu0 0.0
        %611 = vmatpush1.msra.mxu0 0.0
        %612 = vmatprep.subr.mxu0 0.0
        %613 = vmatpush1.msra.mxu0 0.0
        %614 = vmatprep.subr.mxu0 0.0
        %615 = vmatpush1.msra.mxu0 0.0
        %616 = vmatprep.subr.mxu0 0.0
        %617 = vmatpush1.msra.mxu0 0.0
        %618 = vmatprep.subr.mxu0 0.0
        %619 = vmatpush1.msra.mxu0 0.0
        %620 = vmatprep.subr.mxu0 0.0
        %621 = vmatpush1.msra.mxu0 0.0
        %622 = vmatprep.subr.mxu0 0.0
        %623 = vmatpush1.msra.mxu0 0.0
        %624 = vmatprep.subr.mxu0 0.0
        %625 = vmatpush1.msra.mxu0 0.0
        %626 = vmatprep.subr.mxu0 0.0
        %627 = vmatpush1.msra.mxu0 0.0
        %628 = vmatprep.subr.mxu0 0.0
        %629 = vmatpush1.msra.mxu0 0.0
        %630 = vmatprep.subr.mxu0 0.0
        %631 = vmatpush1.msra.mxu0 0.0
        %632 = vmatprep.mubr.f32.mxu0 0.0
        %633 = vmatmul.mubr.f32.gmra.mrb[0].mxu0 %v563
        %v634 = vpop.f32.mrb[0].mxu0
        %v635 = vadd.f32 0.0, %v634
        %v636 = vpop.f32.mrb[0].mxu0
        %637 = vmatprep.mubr.f32.mxu0 0.0
        %638 = vmatmul.mubr.f32.gmra.mrb[0].mxu0 %v566
        %v639 = vpop.f32.mrb[0].mxu0
        %v640 = vadd.f32 0.0, %v639
        %v641 = vpop.f32.mrb[0].mxu0
        %642 = vdwg.mxu0
        %v643 = vld [vmem:[%s2 + $0x1] sm:$0x1]
        %v644 = vlaneseq
        %v645 = vshrl.u32 %v644, 7
        %v646 = vsub.s32 0, %v645
        %v647 = vrot.slane %v643, %v646
        %649 = vrot.lane.b32.xlu0 %v647, 16
        %v650 = vpop.permute.xlu0 %649
        %v652 = vmul.f32 %v383, %v650
        %v653 = vmul.f32 %v388, %v650
        %656 = vrot.lane.b32.xlu0 %v652, 112
        %v657 = vpop.permute.xlu0 %656
        %658 = vrot.lane.b32.xlu0 %v653, 112
        %v659 = vpop.permute.xlu0 %658
        %v662 = vsel %vm509, %v657, 0.0
        %663 = vadd.xlane.f32.xlu0 %v662
        %v664 = vpop.xlane.xlu0 %663
        %v665 = vsel %vm509, %v659, 0.0
        %666 = vadd.xlane.f32.xlu0 %v665
        %v667 = vpop.xlane.xlu0 %666
        %v668 = vlaneseq
        %v669 = vshrl.u32 %v668, 7
        %v670 = vsub.s32 1, %v669
        %v671 = vrot.slane %v495, %v670
        %v672 = vadd.f32 %v664, %v671
        %v673 = vadd.f32 %v667, %v671
        %vm674 = vcmp.gt.f32.partialorder %v672, 0.0
        %vm675 = vcmp.gt.f32.partialorder %v673, 0.0
        %v676 = vmul.f32 %v672, 0.2
        %v677 = vmul.f32 %v673, 0.2
        %v678 = vsel %vm674, %v672, %v676
        %v679 = vsel %vm675, %v673, %v677
        %v680 = vsel %vm500, %v678, -3.4028235e+38
        %v681 = vsel %vm501, %v679, -3.4028235e+38
        %v682 = vsel %vm297, %v680, -inf
        %683 = vmax.xlane.f32.xlu0 %v682
        %v684 = vpop.xlane.xlu0 %683
        %v685 = vsel %vm297, %v681, -inf
        %686 = vmax.xlane.f32.xlu0 %v685
        %v687 = vpop.xlane.xlu0 %686
        %v688 = vsub.f32 %v680, %v684
        %v689 = vsub.f32 %v681, %v687
        %v690 = vmul.f32 %v688, 1.442695
        %v691 = vpow.pop %v690
        %v692 = vmul.f32 %v689, 1.442695
        %v693 = vpow.pop %v692
        %v694 = vsel %vm500, %v691, 0.0
        %v695 = vsel %vm501, %v693, 0.0
        %v696 = vsel %vm297, %v694, 0.0
        %697 = vadd.xlane.f32.xlu0 %v696
        %v698 = vpop.xlane.xlu0 %697
        %v699 = vsel %vm297, %v695, 0.0
        %700 = vadd.xlane.f32.xlu0 %v699
        %v701 = vpop.xlane.xlu0 %700
        %v702 = vmax.f32 %v698, 1e-30
        %v703 = vmax.f32 %v701, 1e-30
        %v704 = vrcp.pop %v702
        %v705 = vrcp.pop %v703
        %v706 = vmul.f32 %v702, %v704
        %v707 = vmul.f32 %v703, %v705
        %v708 = vsub.f32 2.0, %v706
        %v709 = vsub.f32 2.0, %v707
        %v710 = vmul.f32 %v704, %v708
        %v711 = vmul.f32 %v705, %v709
        %v712 = vmul.f32 %v694, %v710
        %v713 = vmul.f32 %v695, %v711
        %714 = vrot.lane.b32.xlu0 %v393, 112
        %v715 = vpop.permute.xlu0 %714
        %716 = vrot.lane.b32.xlu0 %v398, 112
        %v717 = vpop.permute.xlu0 %716
        %718 = vrot.lane.b32.xlu0 %v403, 112
        %v719 = vpop.permute.xlu0 %718
        %720 = vrot.lane.b32.xlu0 %v408, 112
        %v721 = vpop.permute.xlu0 %720
        %v727 = vsel %vm297, %v712, 0
        %v730 = vsel %vm297, %v713, 0
        %732 = vmatprep.subr.mxu0 0.0
        %733 = vmatpush1.msra.mxu0 %v715
        %734 = vmatprep.subr.mxu0 0.0
        %735 = vmatpush1.msra.mxu0 %v717
        %736 = vmatprep.subr.mxu0 0.0
        %737 = vmatpush1.msra.mxu0 %v719
        %738 = vmatprep.subr.mxu0 0.0
        %739 = vmatpush1.msra.mxu0 %v721
        %740 = vmatprep.subr.mxu0 0.0
        %741 = vmatpush1.msra.mxu0 0.0
        %742 = vmatprep.subr.mxu0 0.0
        %743 = vmatpush1.msra.mxu0 0.0
        %744 = vmatprep.subr.mxu0 0.0
        %745 = vmatpush1.msra.mxu0 0.0
        %746 = vmatprep.subr.mxu0 0.0
        %747 = vmatpush1.msra.mxu0 0.0
        %748 = vmatprep.subr.mxu0 0.0
        %749 = vmatpush1.msra.mxu0 0.0
        %750 = vmatprep.subr.mxu0 0.0
        %751 = vmatpush1.msra.mxu0 0.0
        %752 = vmatprep.subr.mxu0 0.0
        %753 = vmatpush1.msra.mxu0 0.0
        %754 = vmatprep.subr.mxu0 0.0
        %755 = vmatpush1.msra.mxu0 0.0
        %756 = vmatprep.subr.mxu0 0.0
        %757 = vmatpush1.msra.mxu0 0.0
        %758 = vmatprep.subr.mxu0 0.0
        %759 = vmatpush1.msra.mxu0 0.0
        %760 = vmatprep.subr.mxu0 0.0
        %761 = vmatpush1.msra.mxu0 0.0
        %762 = vmatprep.subr.mxu0 0.0
        %763 = vmatpush1.msra.mxu0 0.0
        %764 = vmatprep.subr.mxu0 0.0
        %765 = vmatpush1.msra.mxu0 0.0
        %766 = vmatprep.subr.mxu0 0.0
        %767 = vmatpush1.msra.mxu0 0.0
        %768 = vmatprep.subr.mxu0 0.0
        %769 = vmatpush1.msra.mxu0 0.0
        %770 = vmatprep.subr.mxu0 0.0
        %771 = vmatpush1.msra.mxu0 0.0
        %772 = vmatprep.subr.mxu0 0.0
        %773 = vmatpush1.msra.mxu0 0.0
        %774 = vmatprep.subr.mxu0 0.0
        %775 = vmatpush1.msra.mxu0 0.0
        %776 = vmatprep.subr.mxu0 0.0
        %777 = vmatpush1.msra.mxu0 0.0
        %778 = vmatprep.subr.mxu0 0.0
        %779 = vmatpush1.msra.mxu0 0.0
        %780 = vmatprep.subr.mxu0 0.0
        %781 = vmatpush1.msra.mxu0 0.0
        %782 = vmatprep.subr.mxu0 0.0
        %783 = vmatpush1.msra.mxu0 0.0
        %784 = vmatprep.subr.mxu0 0.0
        %785 = vmatpush1.msra.mxu0 0.0
        %786 = vmatprep.subr.mxu0 0.0
        %787 = vmatpush1.msra.mxu0 0.0
        %788 = vmatprep.subr.mxu0 0.0
        %789 = vmatpush1.msra.mxu0 0.0
        %790 = vmatprep.subr.mxu0 0.0
        %791 = vmatpush1.msra.mxu0 0.0
        %792 = vmatprep.subr.mxu0 0.0
        %793 = vmatpush1.msra.mxu0 0.0
        %794 = vmatprep.subr.mxu0 0.0
        %795 = vmatpush1.msra.mxu0 0.0
        %796 = vmatprep.mubr.f32.mxu0 0.0
        %797 = vmatmul.mubr.f32.gmra.mrb[0].mxu0 %v727
        %v798 = vpop.f32.mrb[0].mxu0
        %v799 = vadd.f32 0.0, %v798
        %v800 = vpop.f32.mrb[0].mxu0
        %801 = vmatprep.mubr.f32.mxu0 0.0
        %802 = vmatmul.mubr.f32.gmra.mrb[0].mxu0 %v730
        %v803 = vpop.f32.mrb[0].mxu0
        %v804 = vadd.f32 0.0, %v803
        %v805 = vpop.f32.mrb[0].mxu0
        %806 = vdwg.mxu0
        %809 = vrot.lane.b32.xlu0 %v799, 16
        %v810 = vpop.permute.xlu0 %809
        %811 = vrot.lane.b32.xlu0 %v804, 16
        %v812 = vpop.permute.xlu0 %811
        %v815 = vsel %vm509, %v635, %v810
        %v816 = vsel %vm509, %v640, %v812
        %vm817 = vcmp.gt.f32.partialorder %v815, 0.0
        %vm818 = vcmp.gt.f32.partialorder %v816, 0.0
        %v819 = vmin.f32 %v815, 0.0
        %v820 = vmin.f32 %v816, 0.0
        %v821 = vmul.f32 %v819, 1.442695
        %v822 = vpow.pop %v821
        %v823 = vmul.f32 %v820, 1.442695
        %v824 = vpow.pop %v823
        %v825 = vsub.f32 %v822, 1.0
        %v826 = vsub.f32 %v824, 1.0
        %v827 = vsel %vm817, %v815, %v825
        %v828 = vsel %vm818, %v816, %v826
        %829 = vst.msk [vmem:[%s272] sm:$0xff] %vm297, %v827
        %830 = vst.msk [vmem:[%s272 + $0x8] sm:$0xff] %vm297, %v828
        %s831 = sand.u32 %s169, 1
        %s832 = scalar_lea.sflag [#allocation3], %s831
        %s833 = sand.u32 %s169, 1
        %s834 = smul.addr %s833, 16
        %s835 = scalar_lea.vmem [#allocation2], %s834
        // Predicated region
        $region45: #{tpu_custom_call.1} parent=43 // pred_check
          %p836 = pneg %p179
        $region46: #{tpu_custom_call.1} parent=43 // pred_check_branch
          %838 = sbr.rel (%p836) target = $region48
        $region47: #{tpu_custom_call.1} parent=43 // pred_region
          %s840 = ssub.s32 256, 256
          %841 = vsyncadd %s832, %s840
          %s842 = smul.addr %s20, 2
          %s843 = smul.addr %s842, 128
          %s844 = scalar_lea.hbm %s6, %s843
          %s845 = sshll.u32 %s835, 4
          %s846 = int_to_ptr.vmem [resolvable:$true] %s845
          %851 = dma.vmem_to_hbm [thread:$0]  %s846, 256, %s844, %s832, 128, 128, 8
        $region48: #{tpu_custom_call.1} parent=43 // pred_fallthru
          _
      $region44: #{tpu_custom_call.1} parent=5 // pred_fallthru
        _
      %p852 = scmp.le.s32.totalorder 2, %s15
      // Predicated region
      $region49: #{tpu_custom_call.1} parent=5 // pred_check
        %p853 = pneg %p852
      $region50: #{tpu_custom_call.1} parent=5 // pred_check_branch
        %855 = sbr.rel (%p853) target = $region52
      $region51: #{tpu_custom_call.1} parent=5 // pred_region
        %s856 = ssub.s32 %s15, 2
        // Predicated region
        $region53: #{tpu_custom_call.1} parent=51 // pred_check
          %p857 = pneg %p185
        $region54: #{tpu_custom_call.1} parent=51 // pred_check_branch
          %859 = sbr.rel (%p857) target = $region56
        $region55: #{tpu_custom_call.1} parent=51 // pred_region
          %s860 = sand.u32 %s170, 1
          %s861 = scalar_lea.sflag [#allocation3], %s860
          %s862 = sand.u32 %s170, 1
          %s863 = smul.addr %s862, 16
          %s864 = scalar_lea.vmem [#allocation2], %s863
          %865 = dma.done %s861, 256
        $region56: #{tpu_custom_call.1} parent=51 // pred_fallthru
          _
      $region52: #{tpu_custom_call.1} parent=5 // pred_fallthru
        _
    $region6: #{tpu_custom_call.1} parent=1 // loop_footer
      %s19 = sadd.s32 1, %s15
    $region7: #{tpu_custom_call.1} parent=1 // loop_footer_branch
      %14 = sbr.rel target = $region3
    $region8: #{tpu_custom_call.1} parent=1 // loop_exit
      _
    %866 = vsyncpa [#allocation3], 1
    %s867 = scalar_lea.sflag [#allocation3], 1
    %868 = vsyncpa %s867, 1

</llo_original>
